<compile_context>
chip_gen: v7x
topology: tpu7x:2x2x1
jax: 0.10.0
libtpu: 0.0.40
codegen_flags: <defaults>
</compile_context>

<pallas_src>
import functools

import jax
import jax.numpy as jnp
from jax import lax
from jax.experimental import pallas as pl
from jax.experimental.pallas import tpu as pltpu

_LANE = 128


def _focal_loss_kernel(*refs, gamma, c, hw, tile_rows, s_inner,
                       use_alpha, mask_needed):
    if use_alpha:
        logits_ref, target_ref, alpha_ref, out_ref = refs
    else:
        logits_ref, target_ref, out_ref = refs
        alpha_ref = None

    so = pl.program_id(1)
    si = pl.program_id(2)

    # Zero the resident dense accumulator at the start of each inner sweep.
    @pl.when(si == 0)
    def _():
        out_ref[...] = jnp.zeros_like(out_ref)

    x = logits_ref[...].astype(jnp.float32)      # (1, C, R, 128)
    t = target_ref[...][0, 0]                    # (R, 128) int32

    slabs = [x[0, k] for k in range(c)]          # C dense (R, 128) slabs

    # max over classes: unrolled VPU maxes (no XLU cross-sublane reduce).
    m = slabs[0]
    for k in range(1, c):
        m = jnp.maximum(m, slabs[k])

    # One exp per class element; softmax denominator via VPU adds.
    sh = [slabs[k] - m for k in range(c)]
    ex = [jnp.exp(v) for v in sh]
    sumexp = ex[0]
    for k in range(1, c):
        sumexp = sumexp + ex[k]

    # Gather shifted logit and exp(shifted) at the target class with selects.
    sh_t = sh[0]
    ex_t = ex[0]
    for k in range(1, c):
        is_k = (t == k)
        sh_t = jnp.where(is_k, sh[k], sh_t)
        ex_t = jnp.where(is_k, ex[k], ex_t)

    logsum = jnp.log(sumexp)
    logpt = sh_t - logsum                        # log p_t
    pt = ex_t / sumexp                           # p_t without a second exp

    if use_alpha:
        at = jnp.zeros_like(sh_t) + alpha_ref[0]
        for k in range(1, c):
            at = jnp.where(t == k, alpha_ref[k], at)
        logpt_w = logpt * at
    else:
        logpt_w = logpt

    one_minus_pt = 1.0 - pt
    g = float(gamma)
    if g == 2.0:
        focal = one_minus_pt * one_minus_pt      # single VPU mul
    elif g.is_integer():
        focal = lax.integer_pow(one_minus_pt, int(g))
    else:
        focal = one_minus_pt ** g                # non-integer gamma only

    loss = -1.0 * focal * logpt_w                # (R, 128)

    if mask_needed:
        # Mask out-of-range (padded / garbage edge-block) elements with a
        # select BEFORE accumulation so NaNs never reach the accumulator.
        rows = lax.broadcasted_iota(jnp.int32, loss.shape, 0)
        lanes = lax.broadcasted_iota(jnp.int32, loss.shape, 1)
        block_row0 = (so * s_inner + si) * tile_rows
        gidx = (block_row0 + rows) * _LANE + lanes
        loss = jnp.where(gidx < hw, loss, 0.0)

    # Dense (rows, 128) accumulation -> unmasked, fully packed vst ops.
    out_ref[...] += loss[None, None, :, :]


def focal_loss(x, target, *, gamma=2, alpha=None, size_average=True,
               max_tile_rows=512):
    """x: (N, C, H, W) float, target: (N, H, W) int. Returns scalar loss."""
    N, C, H, W = x.shape
    HW = H * W

    total_rows = pl.cdiv(HW, _LANE)
    HW_pad = total_rows * _LANE

    # NCHW consumed directly; only contiguous reshapes (plus a tail pad iff
    # HW is not a multiple of 128 -- padded elements are masked in-kernel).
    logits = x.reshape(N, C, HW)
    tgt = target.reshape(N, 1, HW).astype(jnp.int32)
    if HW_pad != HW:
        pad = HW_pad - HW
        logits = jnp.pad(logits, ((0, 0), (0, 0), (0, pad)))
        tgt = jnp.pad(tgt, ((0, 0), (0, 0), (0, pad)))
    logits = logits.reshape(N, C, total_rows, _LANE)
    tgt = tgt.reshape(N, 1, total_rows, _LANE)

    # Spatial tile (in 128-lane rows): full extent if it fits, else a large
    # multiple of 8 sublanes.  512 rows * 128 lanes = 64K elems per step.
    if total_rows <= max_tile_rows:
        tile_rows = total_rows
    else:
        tile_rows = max(8, (max_tile_rows // 8) * 8)
    num_row_blocks = pl.cdiv(total_rows, tile_rows)

    # Second parallel axis over spatial super-blocks so v7x megacore has work
    # even when N is 1 or odd.  Harmless on v5e/v6e.
    s_outer = 2 if (num_row_blocks % 2 == 0 and num_row_blocks >= 2) else 1
    s_inner = num_row_blocks // s_outer

    mask_needed = (HW_pad != HW) or (total_rows % tile_rows != 0)

    use_alpha = alpha is not None
    operands = [logits, tgt]
    in_specs = [
        pl.BlockSpec((1, C, tile_rows, _LANE),
                     lambda n, so, si: (n, 0, so * s_inner + si, 0)),
        pl.BlockSpec((1, 1, tile_rows, _LANE),
                     lambda n, so, si: (n, 0, so * s_inner + si, 0)),
    ]
    if use_alpha:
        alpha_arr = jnp.asarray(alpha, dtype=jnp.float32)
        if alpha_arr.ndim == 0:
            alpha_arr = jnp.array([float(alpha), 1.0 - float(alpha)],
                                  dtype=jnp.float32)
        alpha_vec = alpha_arr.reshape(-1)
        assert alpha_vec.shape[0] == C, "alpha must have one entry per class"
        operands.append(alpha_vec)
        in_specs.append(pl.BlockSpec(memory_space=pltpu.MemorySpace.SMEM))

    kernel = functools.partial(
        _focal_loss_kernel,
        gamma=gamma,
        c=C,
        hw=HW,
        tile_rows=tile_rows,
        s_inner=s_inner,
        use_alpha=use_alpha,
        mask_needed=mask_needed,
    )

    partials = pl.pallas_call(
        kernel,
        out_shape=jax.ShapeDtypeStruct((N, s_outer, tile_rows, _LANE),
                                       jnp.float32),
        grid_spec=pltpu.PrefetchScalarGridSpec(
            num_scalar_prefetch=0,
            grid=(N, s_outer, s_inner),
            in_specs=in_specs,
            # Same block across the inner spatial axis -> resident dense VMEM
            # accumulator, one lane-dense writeback per (n, super-block).
            out_specs=pl.BlockSpec((1, 1, tile_rows, _LANE),
                                   lambda n, so, si: (n, so, 0, 0)),
        ),
        compiler_params=pltpu.CompilerParams(
            dimension_semantics=("parallel", "parallel", "arbitrary"),
            vmem_limit_bytes=32 * 1024 * 1024,
        ),
    )(*operands)

    total = jnp.sum(partials)          # tiny reduction in XLA
    if size_average:
        return total / jnp.float32(N * HW)
    return total


def _reference_focal_loss(x, target, gamma=2, alpha=None, size_average=True):
    N, C, H, W = x.shape
    logits = jnp.transpose(x, (0, 2, 3, 1)).reshape(-1, C).astype(jnp.float32)
    t = target.reshape(-1).astype(jnp.int32)
    logp = jax.nn.log_softmax(logits, axis=1)
    logpt = jnp.take_along_axis(logp, t[:, None], axis=1)[:, 0]
    pt = jnp.exp(logpt)
    if alpha is not None:
        alpha_arr = jnp.asarray(alpha, dtype=jnp.float32)
        if alpha_arr.ndim == 0:
            alpha_arr = jnp.array([float(alpha), 1.0 - float(alpha)],
                                  dtype=jnp.float32)
        logpt = logpt * alpha_arr[t]
    loss = -1.0 * (1.0 - pt) ** gamma * logpt
    return loss.mean() if size_average else loss.sum()


if __name__ == "__main__":
    key = jax.random.PRNGKey(0)
    k1, k2 = jax.random.split(key)
    N, C, H, W = 2, 4, 16, 16
    x = jax.random.normal(k1, (N, C, H, W), dtype=jnp.float32)
    target = jax.random.randint(k2, (N, H, W), 0, C, dtype=jnp.int32)

    # Case 1: default gamma=2, no alpha, mean reduction.
    loss = focal_loss(x, target, gamma=2, alpha=None, size_average=True)
    jax.block_until_ready(loss)
    ref = _reference_focal_loss(x, target, gamma=2, alpha=None,
                                size_average=True)
    assert jnp.allclose(loss, ref, atol=1e-5, rtol=1e-5), (loss, ref)

    # Case 2: per-class alpha, sum reduction.
    alpha = [0.25, 0.75, 0.5, 1.0]
    loss2 = focal_loss(x, target, gamma=2, alpha=alpha, size_average=False)
    jax.block_until_ready(loss2)
    ref2 = _reference_focal_loss(x, target, gamma=2, alpha=alpha,
                                 size_average=False)
    assert jnp.allclose(loss2, ref2, atol=1e-4, rtol=1e-5), (loss2, ref2)

    print("KERNEL_OK")
</pallas_src>

<mosaic_0001>
module attributes {stable_mosaic.version = 11 : i64} {
  func.func @_focal_loss_kernel(%arg0: i32, %arg1: i32, %arg2: i32, %arg3: memref<1x4x2x128xf32, #tpu.memory_space<vmem>>, %arg4: memref<1x1x2x128xi32, #tpu.memory_space<vmem>>, %arg5: memref<1x1x2x128xf32, #tpu.memory_space<vmem>>) attributes {dimension_semantics = [#tpu.dimension_semantics<parallel>, #tpu.dimension_semantics<parallel>, #tpu.dimension_semantics<arbitrary>], iteration_bounds = array<i64: 2, 1, 1>, scalar_prefetch = 0 : i64, scratch_operands = 0 : i64, tpu.core_type = #tpu.core_type<tc>, window_params = [{transform_indices = @transform_0, window_bounds = array<i64: 1, 4, 2, 128>}, {transform_indices = @transform_1, window_bounds = array<i64: 1, 1, 2, 128>}, {transform_indices = @transform_2, window_bounds = array<i64: 1, 1, 2, 128>}]} {
    %c0_i32 = arith.constant 0 : i32
    %0 = arith.cmpi eq, %arg2, %c0_i32 : i32
    %1 = arith.extui %0 : i1 to i32
    %c0_i32_0 = arith.constant 0 : i32
    %2 = arith.cmpi ne, %1, %c0_i32_0 : i32
    scf.if %2 {
      %cst_17 = arith.constant 0.000000e+00 : f32
      %53 = vector.broadcast %cst_17 : f32 to vector<1x1x2x128xf32>
      %c0_18 = arith.constant 0 : index
      %c0_19 = arith.constant 0 : index
      %c0_20 = arith.constant 0 : index
      %c0_21 = arith.constant 0 : index
      %54 = vector.load %arg5[%c0_18, %c0_19, %c0_20, %c0_21] : memref<1x1x2x128xf32, #tpu.memory_space<vmem>>, vector<1x1x2x128xf32>
      tpu.vector_store %arg5[%c0_18, %c0_19, %c0_20, %c0_21], %53 {strides = array<i32>} : memref<1x1x2x128xf32, #tpu.memory_space<vmem>>, vector<1x1x2x128xf32>,
    } else {
    }
    %c0 = arith.constant 0 : index
    %c0_1 = arith.constant 0 : index
    %c0_2 = arith.constant 0 : index
    %c0_3 = arith.constant 0 : index
    %3 = vector.load %arg3[%c0, %c0_1, %c0_2, %c0_3] : memref<1x4x2x128xf32, #tpu.memory_space<vmem>>, vector<1x4x2x128xf32>
    %c0_4 = arith.constant 0 : index
    %c0_5 = arith.constant 0 : index
    %c0_6 = arith.constant 0 : index
    %c0_7 = arith.constant 0 : index
    %4 = vector.load %arg4[%c0_4, %c0_5, %c0_6, %c0_7] : memref<1x1x2x128xi32, #tpu.memory_space<vmem>>, vector<1x1x2x128xi32>
    %5 = vector.shape_cast %4 : vector<1x1x2x128xi32> to vector<2x128xi32>
    %6 = vector.extract_strided_slice %3 {offsets = [0, 0, 0, 0], sizes = [1, 1, 2, 128], strides = [1, 1, 1, 1]} : vector<1x4x2x128xf32> to vector<1x1x2x128xf32>
    %7 = vector.shape_cast %6 : vector<1x1x2x128xf32> to vector<2x128xf32>
    %8 = vector.extract_strided_slice %3 {offsets = [0, 1, 0, 0], sizes = [1, 1, 2, 128], strides = [1, 1, 1, 1]} : vector<1x4x2x128xf32> to vector<1x1x2x128xf32>
    %9 = vector.shape_cast %8 : vector<1x1x2x128xf32> to vector<2x128xf32>
    %10 = vector.extract_strided_slice %3 {offsets = [0, 2, 0, 0], sizes = [1, 1, 2, 128], strides = [1, 1, 1, 1]} : vector<1x4x2x128xf32> to vector<1x1x2x128xf32>
    %11 = vector.shape_cast %10 : vector<1x1x2x128xf32> to vector<2x128xf32>
    %12 = vector.extract_strided_slice %3 {offsets = [0, 3, 0, 0], sizes = [1, 1, 2, 128], strides = [1, 1, 1, 1]} : vector<1x4x2x128xf32> to vector<1x1x2x128xf32>
    %13 = vector.shape_cast %12 : vector<1x1x2x128xf32> to vector<2x128xf32>
    %14 = arith.maximumf %7, %9 : vector<2x128xf32>
    %15 = arith.maximumf %14, %11 : vector<2x128xf32>
    %16 = arith.maximumf %15, %13 : vector<2x128xf32>
    %17 = arith.subf %7, %16 : vector<2x128xf32>
    %18 = arith.subf %9, %16 : vector<2x128xf32>
    %19 = arith.subf %11, %16 : vector<2x128xf32>
    %20 = arith.subf %13, %16 : vector<2x128xf32>
    %21 = math.exp %17 : vector<2x128xf32>
    %22 = math.exp %18 : vector<2x128xf32>
    %23 = math.exp %19 : vector<2x128xf32>
    %24 = math.exp %20 : vector<2x128xf32>
    %25 = arith.addf %21, %22 : vector<2x128xf32>
    %26 = arith.addf %25, %23 : vector<2x128xf32>
    %27 = arith.addf %26, %24 : vector<2x128xf32>
    %c1_i32 = arith.constant 1 : i32
    %28 = vector.broadcast %c1_i32 : i32 to vector<2x128xi32>
    %29 = arith.cmpi eq, %5, %28 : vector<2x128xi32>
    %30 = arith.select %29, %18, %17 : vector<2x128xi1>, vector<2x128xf32>
    %31 = arith.select %29, %22, %21 : vector<2x128xi1>, vector<2x128xf32>
    %c2_i32 = arith.constant 2 : i32
    %32 = vector.broadcast %c2_i32 : i32 to vector<2x128xi32>
    %33 = arith.cmpi eq, %5, %32 : vector<2x128xi32>
    %34 = arith.select %33, %19, %30 : vector<2x128xi1>, vector<2x128xf32>
    %35 = arith.select %33, %23, %31 : vector<2x128xi1>, vector<2x128xf32>
    %c3_i32 = arith.constant 3 : i32
    %36 = vector.broadcast %c3_i32 : i32 to vector<2x128xi32>
    %37 = arith.cmpi eq, %5, %36 : vector<2x128xi32>
    %38 = arith.select %37, %20, %34 : vector<2x128xi1>, vector<2x128xf32>
    %39 = arith.select %37, %24, %35 : vector<2x128xi1>, vector<2x128xf32>
    %40 = math.log %27 : vector<2x128xf32>
    %41 = arith.subf %38, %40 : vector<2x128xf32>
    %42 = arith.divf %39, %27 : vector<2x128xf32>
    %cst = arith.constant 1.000000e+00 : f32
    %43 = vector.broadcast %cst : f32 to vector<2x128xf32>
    %44 = arith.subf %43, %42 : vector<2x128xf32>
    %45 = arith.mulf %44, %44 : vector<2x128xf32>
    %cst_8 = arith.constant -1.000000e+00 : f32
    %46 = vector.broadcast %cst_8 : f32 to vector<2x128xf32>
    %47 = arith.mulf %46, %45 : vector<2x128xf32>
    %48 = arith.mulf %47, %41 : vector<2x128xf32>
    %c0_9 = arith.constant 0 : index
    %c0_10 = arith.constant 0 : index
    %c0_11 = arith.constant 0 : index
    %c0_12 = arith.constant 0 : index
    %49 = vector.load %arg5[%c0_9, %c0_10, %c0_11, %c0_12] : memref<1x1x2x128xf32, #tpu.memory_space<vmem>>, vector<1x1x2x128xf32>
    %50 = vector.shape_cast %48 : vector<2x128xf32> to vector<1x1x2x128xf32>
    %51 = arith.addf %49, %50 : vector<1x1x2x128xf32>
    %c0_13 = arith.constant 0 : index
    %c0_14 = arith.constant 0 : index
    %c0_15 = arith.constant 0 : index
    %c0_16 = arith.constant 0 : index
    %52 = vector.load %arg5[%c0_13, %c0_14, %c0_15, %c0_16] : memref<1x1x2x128xf32, #tpu.memory_space<vmem>>, vector<1x1x2x128xf32>
    tpu.vector_store %arg5[%c0_13, %c0_14, %c0_15, %c0_16], %51 {strides = array<i32>} : memref<1x1x2x128xf32, #tpu.memory_space<vmem>>, vector<1x1x2x128xf32>,
    return
  }
  func.func @transform_0(%arg0: i32, %arg1: i32, %arg2: i32) -> (i32, i32, i32, i32) {
    %c1_i32 = arith.constant 1 : i32
    %0 = arith.muli %arg1, %c1_i32 : i32
    %1 = arith.addi %0, %arg2 : i32
    %c0_i32 = arith.constant 0 : i32
    %c0_i32_0 = arith.constant 0 : i32
    %c0_i32_1 = arith.constant 0 : i32
    return %arg0, %c0_i32, %1, %c0_i32_0 : i32, i32, i32, i32
  }
  func.func @transform_1(%arg0: i32, %arg1: i32, %arg2: i32) -> (i32, i32, i32, i32) {
    %c1_i32 = arith.constant 1 : i32
    %0 = arith.muli %arg1, %c1_i32 : i32
    %1 = arith.addi %0, %arg2 : i32
    %c0_i32 = arith.constant 0 : i32
    %c0_i32_0 = arith.constant 0 : i32
    %c0_i32_1 = arith.constant 0 : i32
    return %arg0, %c0_i32, %1, %c0_i32_0 : i32, i32, i32, i32
  }
  func.func @transform_2(%arg0: i32, %arg1: i32, %arg2: i32) -> (i32, i32, i32, i32) {
    %c0_i32 = arith.constant 0 : i32
    %c0_i32_0 = arith.constant 0 : i32
    %c0_i32_1 = arith.constant 0 : i32
    return %arg0, %arg1, %c0_i32, %c0_i32_0 : i32, i32, i32, i32
  }
}

</mosaic_0001>

<llo_original>
// kernel: tpu_custom_call.1
$region0: #{tpu_custom_call.1}
  #allocation0 [shape = 'u32[]', space=smem, size = 0x4, offset = 0x4, fixed_abs, tag = 'smem constant byte address 0x4 - core index']
  #allocation1 [shape = 'u32[144,128]{1,0:T(1,128)}', space=vmem, size = 0x12000, scoped, tag = 'internal scratch']
  %s0 = inlined_call_operand.hbm [shape: f32[2,4,2,128], index: 0, kind: input, shape index: {}]
  %s1 = inlined_call_operand.hbm [shape: s32[2,1,2,128], index: 1, kind: input, shape index: {}]
  %s2 = inlined_call_operand.hbm [shape: f32[2,1,2,128], index: 2, kind: output, shape index: {}]
  %s3 = sld [smem:[#allocation0]]
  $region53: #{tpu_custom_call.1} parent=0
    _
  %s5 = ssub.s32 1, %s3
  %s6 = scalar_select 0, %s5, %s3
  $region1: #{tpu_custom_call.1} parent=0
    #allocation2 [shape = 'u8[8192]{0}', space=vmem, size = 0x2000, scoped, tag = 'input window, operand 0']
    #allocation3 [shape = 's32[2]{0}', space=sflag, size = 0x8, scoped, tag = 'scoped memory for tpu_custom_call.1']
    #allocation4 [shape = 's32[2]{0}', space=sflag, size = 0x8, scoped, tag = 'scoped memory for tpu_custom_call.1']
    #allocation5 [shape = 'u8[2048]{0}', space=vmem, size = 0x800, scoped, tag = 'input window, operand 1']
    #allocation6 [shape = 's32[2]{0}', space=sflag, size = 0x8, scoped, tag = 'scoped memory for tpu_custom_call.1']
    #allocation7 [shape = 'u8[2048]{0}', space=vmem, size = 0x800, scoped, tag = 'output window, operand 0']
    %7 = vsyncpa [#allocation3], 0
    %s8 = scalar_lea.sflag [#allocation3], 1
    %9 = vsyncpa %s8, 0
    %10 = vsyncpa [#allocation6], 0
    %s11 = scalar_lea.sflag [#allocation6], 1
    %12 = vsyncpa %s11, 0
    %13 = vsyncpa [#allocation4], 0
    %s14 = scalar_lea.sflag [#allocation4], 1
    %15 = vsyncpa %s14, 0
    loop: start=0, step=1, limit=4
    $region2: #{tpu_custom_call.1} parent=1 // loop_pre_header
      _
    $region3: #{tpu_custom_call.1} parent=1 // loop_header
      %s17 = sphi 0, %s21
      %p18 = scmp.ge.s32.totalorder %s17, 4
      %s24 = sphi 0, %s43
      %s25 = sphi 0, %s39
      %s26 = sphi 0, %s35
      %s27 = sphi 0, %s24
      %s28 = sphi 0, %s25
      %s29 = sphi 0, %s26
      %s30 = sphi 0, %s27
      %s31 = sphi 0, %s28
      %s32 = sphi 0, %s29
      %s50 = sphi 0, %s52
      %s53 = sphi 0, %s50
      %s54 = sphi 0, %s53
      %s70 = sphi 0, %s54
      %s80 = sphi 0, %s82
      %s83 = sphi 0, %s80
      %s84 = sphi 0, %s83
      %s100 = sphi 0, %s84
      %s108 = sphi 0, %s110
      %s111 = sphi 0, %s108
      %s112 = sphi 0, %s111
      %s128 = sphi 0, %s112
    $region4: #{tpu_custom_call.1} parent=1 // loop_header_branch
      %20 = sbr.rel (%p18) target = $region8
    $region5: #{tpu_custom_call.1} parent=1 // loop_body
      %s22 = ssub.s32 %s17, 1
      %s23 = ssub.s32 %s17, 2
      %s33 = sadd.s32 1, %s26
      %p34 = scmp.ge.s32.totalorder %s33, 1
      %s35 = scalar_select %p34, 0, %s33
      %s36 = sadd.s32 1, %s25
      %s37 = scalar_select %p34, %s36, %s25
      %p38 = scmp.ge.s32.totalorder %s37, 1
      %s39 = scalar_select %p38, 0, %s37
      %s40 = sadd.s32 1, %s24
      %s41 = scalar_select %p38, %s40, %s24
      %p42 = scmp.ge.s32.totalorder %s41, 2
      %s43 = scalar_select %p42, 0, %s41
      %s44 = sadd.s32 %s25, %s26
      %s45 = sadd.s32 %s39, %s35
      %s46 = ssub.s32 %s24, %s43
      %s47 = ssub.s32 %s44, %s45
      %s48 = sor.u32 %s46, %s47
      %p49 = scmp.eq.s32.totalorder %s48, 0
      %s51 = sadd.s32 %s50, 1
      %s52 = scalar_select %p49, %s50, %s51
      %p55 = pneg %p49
      %p56 = scmp.eq.s32.totalorder %s17, 1
      %p57 = por %p55, %p56
      %p58 = scmp.ne.s32.totalorder %s50, %s53
      %p59 = scmp.eq.s32.totalorder %s17, 0
      %p60 = por %p58, %p59
      %p61 = scmp.ne.s32.totalorder %s50, %s53
      %p62 = scmp.eq.s32.totalorder %s22, 1
      %p63 = por %p61, %p62
      %p64 = scmp.ne.s32.totalorder %s53, %s54
      %p65 = scmp.eq.s32.totalorder %s22, 0
      %p66 = por %p64, %p65
      %p67 = scmp.ne.s32.totalorder %s53, %s54
      %p68 = scmp.eq.s32.totalorder %s23, 1
      %p69 = por %p67, %p68
      %p71 = scmp.ne.s32.totalorder %s54, %s70
      %p72 = scmp.eq.s32.totalorder %s23, 0
      %p73 = por %p71, %p72
      %s74 = sadd.s32 %s25, %s26
      %s75 = sadd.s32 %s39, %s35
      %s76 = ssub.s32 %s24, %s43
      %s77 = ssub.s32 %s74, %s75
      %s78 = sor.u32 %s76, %s77
      %p79 = scmp.eq.s32.totalorder %s78, 0
      %s81 = sadd.s32 %s80, 1
      %s82 = scalar_select %p79, %s80, %s81
      %p85 = pneg %p79
      %p86 = scmp.eq.s32.totalorder %s17, 1
      %p87 = por %p85, %p86
      %p88 = scmp.ne.s32.totalorder %s80, %s83
      %p89 = scmp.eq.s32.totalorder %s17, 0
      %p90 = por %p88, %p89
      %p91 = scmp.ne.s32.totalorder %s80, %s83
      %p92 = scmp.eq.s32.totalorder %s22, 1
      %p93 = por %p91, %p92
      %p94 = scmp.ne.s32.totalorder %s83, %s84
      %p95 = scmp.eq.s32.totalorder %s22, 0
      %p96 = por %p94, %p95
      %p97 = scmp.ne.s32.totalorder %s83, %s84
      %p98 = scmp.eq.s32.totalorder %s23, 1
      %p99 = por %p97, %p98
      %p101 = scmp.ne.s32.totalorder %s84, %s100
      %p102 = scmp.eq.s32.totalorder %s23, 0
      %p103 = por %p101, %p102
      %s104 = ssub.s32 %s24, %s43
      %s105 = ssub.s32 %s25, %s39
      %s106 = sor.u32 %s104, %s105
      %p107 = scmp.eq.s32.totalorder %s106, 0
      %s109 = sadd.s32 %s108, 1
      %s110 = scalar_select %p107, %s108, %s109
      %p113 = pneg %p107
      %p114 = scmp.eq.s32.totalorder %s17, 1
      %p115 = por %p113, %p114
      %p116 = scmp.ne.s32.totalorder %s108, %s111
      %p117 = scmp.eq.s32.totalorder %s17, 0
      %p118 = por %p116, %p117
      %p119 = scmp.ne.s32.totalorder %s108, %s111
      %p120 = scmp.eq.s32.totalorder %s22, 1
      %p121 = por %p119, %p120
      %p122 = scmp.ne.s32.totalorder %s111, %s112
      %p123 = scmp.eq.s32.totalorder %s22, 0
      %p124 = por %p122, %p123
      %p125 = scmp.ne.s32.totalorder %s111, %s112
      %p126 = scmp.eq.s32.totalorder %s23, 1
      %p127 = por %p125, %p126
      %p129 = scmp.ne.s32.totalorder %s112, %s128
      %p130 = scmp.eq.s32.totalorder %s23, 0
      %p131 = por %p129, %p130
      %p132 = scmp.le.s32.totalorder 1, %s17
      %p133 = scmp.lt.s32.totalorder %s17, 3
      %p134 = pnand %p132, %p133
      %p135 = pneg %p134
      // Predicated region
      $region9: #{tpu_custom_call.1} parent=5 // pred_check
        _
      $region10: #{tpu_custom_call.1} parent=5 // pred_check_branch
        %137 = sbr.rel (%p134) target = $region12
      $region11: #{tpu_custom_call.1} parent=5 // pred_region
        %s138 = ssub.s32 %s17, 1
      $region12: #{tpu_custom_call.1} parent=5 // pred_fallthru
        _
      %p139 = scmp.lt.s32.totalorder %s17, 2
      // Predicated region
      $region13: #{tpu_custom_call.1} parent=5 // pred_check
        %p140 = pneg %p139
      $region14: #{tpu_custom_call.1} parent=5 // pred_check_branch
        %142 = sbr.rel (%p140) target = $region16
      $region15: #{tpu_custom_call.1} parent=5 // pred_region
        // Predicated region
        $region17: #{tpu_custom_call.1} parent=15 // pred_check
          %p143 = pneg %p60
        $region18: #{tpu_custom_call.1} parent=15 // pred_check_branch
          %145 = sbr.rel (%p143) target = $region20
        $region19: #{tpu_custom_call.1} parent=15 // pred_region
          %s146 = sand.u32 %s50, 1
          %s147 = scalar_lea.sflag [#allocation3], %s146
          %s148 = sand.u32 %s50, 1
          %s149 = smul.addr %s148, 8
          %s150 = scalar_lea.vmem [#allocation2], %s149
          %s151 = sadd.s32 %s25, %s26
          %s153 = ssub.s32 128, 128
          %154 = vsyncadd %s147, %s153
          %s155 = smul.addr %s24, 4
          %s156 = sadd.s32 %s151, %s155
          %s157 = smul.addr %s156, 32
          %s158 = scalar_lea.hbm %s0, %s157
          %s159 = sshll.u32 %s150, 4
          %s160 = int_to_ptr.vmem [resolvable:$true] %s159
          %165 = dma.hbm_to_vmem [thread:$0]  %s158, 128, %s160, %s147, 32, 32, 2
        $region20: #{tpu_custom_call.1} parent=15 // pred_fallthru
          _
        // Predicated region
        $region21: #{tpu_custom_call.1} parent=15 // pred_check
          %p166 = pneg %p90
        $region22: #{tpu_custom_call.1} parent=15 // pred_check_branch
          %168 = sbr.rel (%p166) target = $region24
        $region23: #{tpu_custom_call.1} parent=15 // pred_region
          %s169 = sand.u32 %s80, 1
          %s170 = scalar_lea.sflag [#allocation6], %s169
          %s171 = sand.u32 %s80, 1
          %s172 = smul.addr %s171, 2
          %s173 = scalar_lea.vmem [#allocation5], %s172
          %s174 = sadd.s32 %s25, %s26
          %s176 = ssub.s32 32, 32
          %177 = vsyncadd %s170, %s176
          %s178 = sadd.s32 %s174, %s24
          %s179 = smul.addr %s178, 32
          %s180 = scalar_lea.hbm %s1, %s179
          %s182 = sshll.u32 %s173, 4
          %s183 = int_to_ptr.vmem [resolvable:$true] %s182
          %185 = dma.hbm_to_vmem [thread:$0]  %s180, 32, %s183, %s170
        $region24: #{tpu_custom_call.1} parent=15 // pred_fallthru
          _
      $region16: #{tpu_custom_call.1} parent=5 // pred_fallthru
        _
      %p186 = scmp.le.s32.totalorder 1, %s17
      %p187 = scmp.lt.s32.totalorder %s17, 3
      %p188 = pnand %p186, %p187
      %p189 = pneg %p188
      // Predicated region
      $region25: #{tpu_custom_call.1} parent=5 // pred_check
        _
      $region26: #{tpu_custom_call.1} parent=5 // pred_check_branch
        %191 = sbr.rel (%p188) target = $region28
      $region27: #{tpu_custom_call.1} parent=5 // pred_region
        %s192 = ssub.s32 %s17, 1
        %s193 = sand.u32 %s53, 1
        %s194 = scalar_lea.sflag [#allocation3], %s193
        %s195 = sand.u32 %s53, 1
        %s196 = smul.addr %s195, 8
        %s197 = scalar_lea.vmem [#allocation2], %s196
        // Predicated region
        $region29: #{tpu_custom_call.1} parent=27 // pred_check
          %p198 = pneg %p66
        $region30: #{tpu_custom_call.1} parent=27 // pred_check_branch
          %200 = sbr.rel (%p198) target = $region32
        $region31: #{tpu_custom_call.1} parent=27 // pred_region
          %201 = dma.done %s194, 128
        $region32: #{tpu_custom_call.1} parent=27 // pred_fallthru
          _
        %s202 = sand.u32 %s83, 1
        %s203 = scalar_lea.sflag [#allocation6], %s202
        %s204 = sand.u32 %s83, 1
        %s205 = smul.addr %s204, 2
        %s206 = scalar_lea.vmem [#allocation5], %s205
        // Predicated region
        $region33: #{tpu_custom_call.1} parent=27 // pred_check
          %p207 = pneg %p96
        $region34: #{tpu_custom_call.1} parent=27 // pred_check_branch
          %209 = sbr.rel (%p207) target = $region36
        $region35: #{tpu_custom_call.1} parent=27 // pred_region
          %210 = dma.done %s203, 32
        $region36: #{tpu_custom_call.1} parent=27 // pred_fallthru
          _
        %s211 = sand.u32 %s53, 1
        %s212 = scalar_lea.sflag [#allocation3], %s211
        %s213 = sand.u32 %s53, 1
        %s214 = smul.addr %s213, 8
        %s215 = scalar_lea.vmem [#allocation2], %s214
        %p216 = pneg %p66
        %p217 = pneg %p63
        %s218 = sand.u32 %s83, 1
        %s219 = scalar_lea.sflag [#allocation6], %s218
        %s220 = sand.u32 %s83, 1
        %s221 = smul.addr %s220, 2
        %s222 = scalar_lea.vmem [#allocation5], %s221
        %p223 = pneg %p96
        %p224 = pneg %p93
        %p225 = pneg %p124
        %p226 = pneg %p121
        %s227 = sand.u32 %s111, 1
        %s228 = scalar_lea.sflag [#allocation4], %s227
        %s229 = sand.u32 %s111, 1
        %s230 = smul.addr %s229, 2
        %s231 = scalar_lea.vmem [#allocation7], %s230
        %s232 = sadd.s32 %s28, %s29
        %s233 = sadd.s32 %s28, %s29
        %p234 = scmp.eq.s32.totalorder %s29, 0
        // Predicated region
        $region37: #{tpu_custom_call.1} parent=27 // pred_check
          %p235 = pneg %p234
        $region38: #{tpu_custom_call.1} parent=27 // pred_check_branch
          %237 = sbr.rel (%p235) target = $region40
        $region39: #{tpu_custom_call.1} parent=27 // pred_region
          %238 = vst [vmem:[%s231] sm:$0x3] 0.0
        $region40: #{tpu_custom_call.1} parent=27 // pred_fallthru
          _
        %v239 = vld [vmem:[%s197] sm:$0x3]
        %v240 = vld [vmem:[%s197 + $0x2] sm:$0x3]
        %v241 = vld [vmem:[%s197 + $0x4] sm:$0x3]
        %v242 = vld [vmem:[%s197 + $0x6] sm:$0x3]
        %v243 = vld [vmem:[%s206] sm:$0x3]
        %v244 = vmax.f32 %v239, %v240
        %v245 = vmax.f32 %v244, %v241
        %v246 = vmax.f32 %v245, %v242
        %v247 = vsub.f32 %v239, %v246
        %v248 = vsub.f32 %v240, %v246
        %v249 = vsub.f32 %v241, %v246
        %v250 = vsub.f32 %v242, %v246
        %v251 = vmul.f32 %v247, 1.442695
        %v252 = vpow.pop %v251
        %v253 = vmul.f32 %v248, 1.442695
        %v254 = vpow.pop %v253
        %v255 = vmul.f32 %v249, 1.442695
        %v256 = vpow.pop %v255
        %v257 = vmul.f32 %v250, 1.442695
        %v258 = vpow.pop %v257
        %v259 = vadd.f32 %v252, %v254
        %v260 = vadd.f32 %v259, %v256
        %v261 = vadd.f32 %v260, %v258
        %vm262 = vcmp.eq.s32.totalorder %v243, 1
        %v263 = vsel %vm262, %v248, %v247
        %v264 = vsel %vm262, %v254, %v252
        %vm265 = vcmp.eq.s32.totalorder %v243, 2
        %v266 = vsel %vm265, %v249, %v263
        %v267 = vsel %vm265, %v256, %v264
        %vm268 = vcmp.eq.s32.totalorder %v243, 3
        %v269 = vsel %vm268, %v250, %v266
        %v270 = vsel %vm268, %v258, %v267
        %v271 = vlog2.pop %v261
        %v272 = vmul.f32 %v271, 0.6931472
        %v273 = vsub.f32 %v269, %v272
        %v274 = vrcp.pop %v261
        %v275 = vmul.f32 %v270, %v274
        %v276 = vsub.f32 1.0, %v275
        %v277 = vmul.f32 %v276, %v276
        %v278 = vmul.f32 %v277, -1.0
        %v279 = vmul.f32 %v278, %v273
        %v280 = vld [vmem:[%s231] sm:$0x3]
        %v281 = vadd.f32 %v280, %v279
        %282 = vst [vmem:[%s231] sm:$0x3] %v281
        %s283 = sand.u32 %s111, 1
        %s284 = scalar_lea.sflag [#allocation4], %s283
        %s285 = sand.u32 %s111, 1
        %s286 = smul.addr %s285, 2
        %s287 = scalar_lea.vmem [#allocation7], %s286
        // Predicated region
        $region41: #{tpu_custom_call.1} parent=27 // pred_check
          %p288 = pneg %p121
        $region42: #{tpu_custom_call.1} parent=27 // pred_check_branch
          %290 = sbr.rel (%p288) target = $region44
        $region43: #{tpu_custom_call.1} parent=27 // pred_region
          %s292 = ssub.s32 32, 32
          %293 = vsyncadd %s284, %s292
          %s294 = sadd.s32 %s28, %s27
          %s295 = smul.addr %s294, 32
          %s296 = scalar_lea.hbm %s2, %s295
          %s298 = sshll.u32 %s287, 4
          %s299 = int_to_ptr.vmem [resolvable:$true] %s298
          %301 = dma.vmem_to_hbm [thread:$0]  %s299, 32, %s296, %s284
        $region44: #{tpu_custom_call.1} parent=27 // pred_fallthru
          _
      $region28: #{tpu_custom_call.1} parent=5 // pred_fallthru
        _
      %p302 = scmp.le.s32.totalorder 2, %s17
      // Predicated region
      $region45: #{tpu_custom_call.1} parent=5 // pred_check
        %p303 = pneg %p302
      $region46: #{tpu_custom_call.1} parent=5 // pred_check_branch
        %305 = sbr.rel (%p303) target = $region48
      $region47: #{tpu_custom_call.1} parent=5 // pred_region
        %s306 = ssub.s32 %s17, 2
        // Predicated region
        $region49: #{tpu_custom_call.1} parent=47 // pred_check
          %p307 = pneg %p127
        $region50: #{tpu_custom_call.1} parent=47 // pred_check_branch
          %309 = sbr.rel (%p307) target = $region52
        $region51: #{tpu_custom_call.1} parent=47 // pred_region
          %s310 = sand.u32 %s112, 1
          %s311 = scalar_lea.sflag [#allocation4], %s310
          %s312 = sand.u32 %s112, 1
          %s313 = smul.addr %s312, 2
          %s314 = scalar_lea.vmem [#allocation7], %s313
          %315 = dma.done %s311, 32
        $region52: #{tpu_custom_call.1} parent=47 // pred_fallthru
          _
      $region48: #{tpu_custom_call.1} parent=5 // pred_fallthru
        _
    $region6: #{tpu_custom_call.1} parent=1 // loop_footer
      %s21 = sadd.s32 1, %s17
    $region7: #{tpu_custom_call.1} parent=1 // loop_footer_branch
      %16 = sbr.rel target = $region3
    $region8: #{tpu_custom_call.1} parent=1 // loop_exit
      _
    %316 = vsyncpa [#allocation3], 1
    %s317 = scalar_lea.sflag [#allocation3], 1
    %318 = vsyncpa %s317, 1
    %319 = vsyncpa [#allocation6], 1
    %s320 = scalar_lea.sflag [#allocation6], 1
    %321 = vsyncpa %s320, 1
    %322 = vsyncpa [#allocation4], 1
    %s323 = scalar_lea.sflag [#allocation4], 1
    %324 = vsyncpa %s323, 1

</llo_original>
